<compile_context>
chip_gen: v7x
topology: tpu7x:2x2x1
jax: 0.10.0
libtpu: 0.0.40
codegen_flags: <defaults>
</compile_context>

<pallas_src>
import functools

import numpy as np
import jax
import jax.numpy as jnp
from jax import lax
from jax.experimental import pallas as pl
from jax.experimental.pallas import tpu as pltpu


def _hardswish(x):
    return x * jnp.clip(x + 3.0, 0.0, 6.0) * (1.0 / 6.0)


def _gated_residual_kernel(x_ref, w_ref, b_ref, dww_ref, dwb_ref, mask_ref,
                           *rest, k, s, W, M, TBC, TBF):
    if s > 1:
        sel_ref, out_ref = rest
    else:
        (out_ref,) = rest
        sel_ref = None

    p = (k - 1) // 2
    x = x_ref[...].astype(jnp.float32)                       # (TB*C, H*W)

    # ---- depthwise kxk, "same" padding, bn1 folded --------------------------
    # Per tap: one XLU lane rotation + per-row tap weight + per-lane boundary
    # mask (2 VPU muls + 1 add).  Centre tap needs neither roll nor mask.
    acc = dwb_ref[...] + x * dww_ref[p * k + p]
    for kh in range(k):
        for kw in range(k):
            d = (kh - p) * W + (kw - p)                      # flat source offset
            if d == 0:
                continue
            shifted = pltpu.roll(x, shift=(-d) % M, axis=1)
            acc = acc + shifted * dww_ref[kh * k + kw] * mask_ref[kh * k + kw]

    # ---- stack [main pre-activation ; shortcut input] -----------------------
    rhs = jnp.concatenate([acc, x], axis=0)                  # (2*TB*C, H*W)
    if s > 1:
        # stride-s spatial subsampling as one matmul against a static 0/1
        # (M, Mo) selection matrix (MXU is idle; avoids in-kernel strided
        # lane slices which would materialize VMEM copies).
        rhs = jnp.dot(rhs, sel_ref[...], preferred_element_type=jnp.float32)
    # hardswish only on the main-path rows (top TB*C rows).
    row = lax.broadcasted_iota(jnp.int32, (2 * TBC, 1), 0)
    rhs = jnp.where(row < TBC, _hardswish(rhs), rhs)

    # ---- one block-diagonal matmul: [pointwise ; gate ; shortcut] x TB imgs -
    out_all = jnp.dot(w_ref[...], rhs,
                      preferred_element_type=jnp.float32) + b_ref[...]
    y = out_all[:TBF]                                        # pointwise(+bn2)
    g = jax.nn.sigmoid(out_all[TBF:2 * TBF])                 # gate(+bn_gate)
    sc = out_all[2 * TBF:]                                   # shortcut(+bn_sc)
    out_ref[...] = _hardswish(y * g + sc).astype(out_ref.dtype)


def _fold_bn(gamma, beta, mean, var, eps):
    a = gamma / jnp.sqrt(var + eps)
    return a, beta - a * mean


def _boundary_masks(k, H, W):
    """(k*k, H*W) float32 zero-padding masks per depthwise tap (static)."""
    p = (k - 1) // 2
    r = np.arange(H)[:, None]
    c = np.arange(W)[None, :]
    masks = []
    for kh in range(k):
        for kw in range(k):
            dh, dw = kh - p, kw - p
            m = ((r + dh >= 0) & (r + dh < H) &
                 (c + dw >= 0) & (c + dw < W))
            masks.append(m.reshape(-1))
    return np.stack(masks).astype(np.float32)


def _stride_select(H, W, Ho, Wo, s):
    """Static (H*W, Ho*Wo) 0/1 matrix selecting positions (ho*s, wo*s)."""
    sel = np.zeros((H * W, Ho * Wo), np.float32)
    for ho in range(Ho):
        for wo in range(Wo):
            sel[ho * s * W + wo * s, ho * Wo + wo] = 1.0
    return sel


def _pick_block_batch(N, C, F, M, Mo, budget_bytes=16 << 20, min_steps=4):
    """Largest batch tile TB (divisor of N) whose pipeline footprint fits the
    VMEM budget and whose flattened TB*C / TB*F row counts are sublane-aligned.
    Prefer leaving >= min_steps grid steps so both double-buffering and the
    multi-TensorCore split stay alive on larger batches."""
    def cost(t):
        return 4 * (2 * t * (C * M + F * Mo)            # double-buffered x/out
                    + (3 * t * F) * (2 * t * C))        # block-diag weights
    def aligned(t):
        return t == N or ((t * C) % 8 == 0 and (t * F) % 8 == 0)
    divs = [t for t in range(1, N + 1) if N % t == 0]
    fitting = [t for t in divs if aligned(t) and cost(t) <= budget_bytes]
    if not fitting:
        return N                                        # shape-legal fallback
    pipelined = [t for t in fitting if N // t >= min_steps]
    return max(pipelined) if pipelined else max(fitting)


def gated_residual_block(x_nchw, params, kernel_size, strides, eps=1e-5,
                         block_batch=None):
    """GatedResidualBlock forward (BN in inference mode). x_nchw: (N,C,H,W) f32."""
    k, s = kernel_size, strides
    assert k % 2 == 1, "kernel_size must be odd"
    p = (k - 1) // 2
    N, C, H, W = x_nchw.shape
    F_out = params['pw_sc_w'].shape[0]
    Ho = (H + 2 * p - k) // s + 1
    Wo = (W + 2 * p - k) // s + 1
    M, Mo = H * W, Ho * Wo

    TB = block_batch if block_batch is not None else _pick_block_batch(
        N, C, F_out, M, Mo)
    assert N % TB == 0, (N, TB)
    TBC, TBF = TB * C, TB * F_out

    # ---- fold BN (inference) into the convolutions --------------------------
    a_s, c_s = _fold_bn(params['bn_sc_g'], params['bn_sc_b'],
                        params['bn_sc_m'], params['bn_sc_v'], eps)
    a1, c1 = _fold_bn(params['bn1_g'], params['bn1_b'],
                      params['bn1_m'], params['bn1_v'], eps)
    a2, c2 = _fold_bn(params['bn2_g'], params['bn2_b'],
                      params['bn2_m'], params['bn2_v'], eps)
    ag, cg = _fold_bn(params['bng_g'], params['bng_b'],
                      params['bng_m'], params['bng_v'], eps)

    # depthwise kxk + bn1: per-channel tap weights (tiled over TB images) and
    # the channel-independent (k*k, M) boundary-mask stack -- kept factored.
    dw_w = params['dw_w'].reshape(C, k * k) * a1[:, None]                # (C, kk)
    dw_b = params['dw_b'] * a1 + c1                                      # (C,)
    dww = jnp.tile(dw_w, (TB, 1)).T.reshape(k * k, TBC, 1)               # (kk, TB*C, 1)
    dwb = jnp.tile(dw_b, TB)[:, None]                                    # (TB*C, 1)
    masks = jnp.asarray(_boundary_masks(k, H, W)).reshape(k * k, 1, M)   # (kk, 1, M)

    # pointwise + bn2
    w_pw = params['pw_w'].reshape(F_out, C) * a2[:, None]
    b_pw = params['pw_b'] * a2 + c2
    # gate + bn_gate, fused through the pointwise
    w_g = params['g_w'].reshape(F_out, F_out) * ag[:, None]
    b_g = params['g_b'] * ag + cg
    w_gf = w_g @ w_pw
    b_gf = w_g @ b_pw + b_g
    # shortcut: 1x1 depthwise folded into pointwise_shortcut + bn_shortcut
    d_s = params['dw_sc_w'].reshape(C)
    d_b = params['dw_sc_b']
    w_ps = params['pw_sc_w'].reshape(F_out, C) * a_s[:, None]
    b_ps = params['pw_sc_b'] * a_s + c_s
    w_sc = w_ps * d_s[None, :]
    b_sc = w_ps @ d_b + b_ps

    # One block-diagonal LHS (3*TB*F, 2*TB*C) against RHS = [h ; xs]:
    #   [ pw_bd   0     ]  -> rows [0,      TB*F )  = pointwise output
    #   [ gate_bd 0     ]  -> rows [TB*F,  2TB*F )  = gate pre-activation
    #   [ 0       sc_bd ]  -> rows [2TB*F, 3TB*F )  = shortcut
    eye = jnp.eye(TB, dtype=jnp.float32)
    pw_bd = jnp.kron(eye, w_pw)
    gf_bd = jnp.kron(eye, w_gf)
    sc_bd = jnp.kron(eye, w_sc)
    z = jnp.zeros((TBF, TBC), jnp.float32)
    w_big = jnp.concatenate([
        jnp.concatenate([pw_bd, z], axis=1),
        jnp.concatenate([gf_bd, z], axis=1),
        jnp.concatenate([z, sc_bd], axis=1)], axis=0)                    # (3TBF, 2TBC)
    b_big = jnp.concatenate([jnp.tile(b_pw, TB), jnp.tile(b_gf, TB),
                             jnp.tile(b_sc, TB)])[:, None]               # (3TBF, 1)

    x2 = x_nchw.reshape(N * C, M)        # free view: NCHW consumed directly

    operands = [x2, w_big, b_big, dww, dwb, masks]
    in_specs = [
        pl.BlockSpec((TBC, M), lambda b: (b, 0)),
        # invariant operands: constant index maps -> fetched once across grid
        pl.BlockSpec((3 * TBF, 2 * TBC), lambda b: (0, 0)),
        pl.BlockSpec((3 * TBF, 1), lambda b: (0, 0)),
        pl.BlockSpec((k * k, TBC, 1), lambda b: (0, 0, 0)),
        pl.BlockSpec((TBC, 1), lambda b: (0, 0)),
        pl.BlockSpec((k * k, 1, M), lambda b: (0, 0, 0)),
    ]
    if s > 1:
        operands.append(jnp.asarray(_stride_select(H, W, Ho, Wo, s)))
        in_specs.append(pl.BlockSpec((M, Mo), lambda b: (0, 0)))

    kernel = functools.partial(_gated_residual_kernel, k=k, s=s, W=W, M=M,
                               TBC=TBC, TBF=TBF)

    # Explicit VMEM budget (safe on v5e/v6e 128 MiB and v7x 64 MiB).
    vmem_est = 4 * (2 * (TBC * M + TBF * Mo)            # double-buffered x/out
                    + 2 * (3 * TBF) * (2 * TBC)         # block-diag weights
                    + 2 * k * k * (8 * M + 8 * 128)     # padded masks + tap w
                    + 8 * TBC * max(M, Mo))             # in-kernel temporaries
    vmem_limit = int(min(max(2 * vmem_est, 8 << 20), 32 << 20))

    # NOTE: for production-size images add an Ho-row-tile grid axis with a
    # (k-1)/2-row halo (re-derive the tile per TPU generation: 64 MiB VMEM on
    # v7x vs 128 MiB on v5e/v6e) and keep the stored last dim a multiple of
    # 128 lanes when s > 1 shrinks Ho*Wo below 128.
    out = pl.pallas_call(
        kernel,
        out_shape=jax.ShapeDtypeStruct((N * F_out, Mo), jnp.float32),
        grid_spec=pltpu.PrefetchScalarGridSpec(
            num_scalar_prefetch=0,
            grid=(N // TB,),
            in_specs=in_specs,
            out_specs=pl.BlockSpec((TBF, Mo), lambda b: (b, 0)),
        ),
        compiler_params=pltpu.CompilerParams(
            dimension_semantics=("parallel",),
            vmem_limit_bytes=vmem_limit),
    )(*operands)

    # free view back to the PyTorch NCHW convention
    return out.reshape(N, F_out, Ho, Wo)


# ---------------- pure-JAX reference (mirrors the PyTorch forward) ----------
def _ref_forward(x_nchw, P, k, s, eps=1e-5):
    pad = (k - 1) // 2

    def conv(x, w, b, stride, padding, groups=1):
        y = lax.conv_general_dilated(
            x, w, (stride, stride), [(padding, padding)] * 2,
            feature_group_count=groups,
            dimension_numbers=('NCHW', 'OIHW', 'NCHW'))
        return y + b[None, :, None, None]

    def bn(x, g, be, m, v):
        inv = g / jnp.sqrt(v + eps)
        return x * inv[None, :, None, None] + (be - m * inv)[None, :, None, None]

    C = x_nchw.shape[1]
    shortcut = conv(x_nchw, P['dw_sc_w'], P['dw_sc_b'], s, 0, groups=C)
    shortcut = conv(shortcut, P['pw_sc_w'], P['pw_sc_b'], 1, 0)
    shortcut = bn(shortcut, P['bn_sc_g'], P['bn_sc_b'], P['bn_sc_m'], P['bn_sc_v'])

    h = conv(x_nchw, P['dw_w'], P['dw_b'], s, pad, groups=C)
    h = _hardswish(bn(h, P['bn1_g'], P['bn1_b'], P['bn1_m'], P['bn1_v']))
    h = conv(h, P['pw_w'], P['pw_b'], 1, 0)
    h = bn(h, P['bn2_g'], P['bn2_b'], P['bn2_m'], P['bn2_v'])
    gate = jax.nn.sigmoid(
        bn(conv(h, P['g_w'], P['g_b'], 1, 0),
           P['bng_g'], P['bng_b'], P['bng_m'], P['bng_v']))
    return _hardswish(h * gate + shortcut)


def _init_params(key, in_channels, filters, kernel_size):
    C, F, k = in_channels, filters, kernel_size
    ks = jax.random.split(key, 16)

    def nrm(kk, shape, scale=0.1):
        return scale * jax.random.normal(kk, shape, jnp.float32)

    def bn_params(k1, k2, k3, k4, n):
        return (1.0 + nrm(k1, (n,)), nrm(k2, (n,)), nrm(k3, (n,)),
                1.0 + 0.1 * jnp.abs(jax.random.normal(k4, (n,), jnp.float32)))

    p = {}
    p['dw_sc_w'] = nrm(ks[0], (C, 1, 1, 1));   p['dw_sc_b'] = nrm(ks[1], (C,))
    p['pw_sc_w'] = nrm(ks[2], (F, C, 1, 1));   p['pw_sc_b'] = nrm(ks[3], (F,))
    p['dw_w'] = nrm(ks[4], (C, 1, k, k));      p['dw_b'] = nrm(ks[5], (C,))
    p['pw_w'] = nrm(ks[6], (F, C, 1, 1));      p['pw_b'] = nrm(ks[7], (F,))
    p['g_w'] = nrm(ks[8], (F, F, 1, 1));       p['g_b'] = nrm(ks[9], (F,))
    p['bn_sc_g'], p['bn_sc_b'], p['bn_sc_m'], p['bn_sc_v'] = bn_params(
        *jax.random.split(ks[10], 4), F)
    p['bn1_g'], p['bn1_b'], p['bn1_m'], p['bn1_v'] = bn_params(
        *jax.random.split(ks[11], 4), C)
    p['bn2_g'], p['bn2_b'], p['bn2_m'], p['bn2_v'] = bn_params(
        *jax.random.split(ks[12], 4), F)
    p['bng_g'], p['bng_b'], p['bng_m'], p['bng_v'] = bn_params(
        *jax.random.split(ks[13], 4), F)
    return p


if __name__ == "__main__":
    in_channels, filters, kernel_size, strides = 4, 8, 3, 1
    N, H, W = 2, 16, 16

    key = jax.random.PRNGKey(0)
    kx, kp = jax.random.split(key)
    x = jax.random.normal(kx, (N, in_channels, H, W), jnp.float32)
    params = _init_params(kp, in_channels, filters, kernel_size)

    out = gated_residual_block(x, params, kernel_size, strides)
    out = jax.block_until_ready(out)

    ref = _ref_forward(x, params, kernel_size, strides)
    assert out.shape == ref.shape, (out.shape, ref.shape)
    assert jnp.allclose(out, ref, atol=1e-4, rtol=1e-4), \
        float(jnp.max(jnp.abs(out - ref)))

    print("KERNEL_OK")
</pallas_src>

<mosaic_0001>
module attributes {stable_mosaic.version = 11 : i64} {
  func.func @_gated_residual_kernel(%arg0: i32, %arg1: memref<8x256xf32, #tpu.memory_space<vmem>>, %arg2: memref<48x16xf32, #tpu.memory_space<vmem>>, %arg3: memref<48x1xf32, #tpu.memory_space<vmem>>, %arg4: memref<9x8x1xf32, #tpu.memory_space<vmem>>, %arg5: memref<8x1xf32, #tpu.memory_space<vmem>>, %arg6: memref<9x1x256xf32, #tpu.memory_space<vmem>>, %arg7: memref<16x256xf32, #tpu.memory_space<vmem>>) attributes {dimension_semantics = [#tpu.dimension_semantics<parallel>], iteration_bounds = array<i64: 1>, scalar_prefetch = 0 : i64, scratch_operands = 0 : i64, tpu.core_type = #tpu.core_type<tc>, window_params = [{transform_indices = @transform_0, window_bounds = array<i64: 8, 256>}, {pipeline_mode = #tpu.pipeline_mode<synchronous>, transform_indices = @transform_1, window_bounds = array<i64: 48, 16>}, {pipeline_mode = #tpu.pipeline_mode<synchronous>, transform_indices = @transform_2, window_bounds = array<i64: 48, 1>}, {pipeline_mode = #tpu.pipeline_mode<synchronous>, transform_indices = @transform_3, window_bounds = array<i64: 9, 8, 1>}, {pipeline_mode = #tpu.pipeline_mode<synchronous>, transform_indices = @transform_4, window_bounds = array<i64: 8, 1>}, {pipeline_mode = #tpu.pipeline_mode<synchronous>, transform_indices = @transform_5, window_bounds = array<i64: 9, 1, 256>}, {transform_indices = @transform_6, window_bounds = array<i64: 16, 256>}]} {
    %c0 = arith.constant 0 : index
    %c0_0 = arith.constant 0 : index
    %0 = vector.load %arg1[%c0, %c0_0] : memref<8x256xf32, #tpu.memory_space<vmem>>, vector<8x256xf32>
    %c0_1 = arith.constant 0 : index
    %c0_2 = arith.constant 0 : index
    %1 = vector.load %arg5[%c0_1, %c0_2] : memref<8x1xf32, #tpu.memory_space<vmem>>, vector<8x1xf32>
    %c4 = arith.constant 4 : index
    %c0_3 = arith.constant 0 : index
    %c0_4 = arith.constant 0 : index
    %2 = vector.load %arg4[%c4, %c0_3, %c0_4] : memref<9x8x1xf32, #tpu.memory_space<vmem>>, vector<1x8x1xf32>
    %3 = vector.shape_cast %2 : vector<1x8x1xf32> to vector<8x1xf32>
    %4 = vector.broadcast %3 : vector<8x1xf32> to vector<8x256xf32>
    %5 = arith.mulf %0, %4 : vector<8x256xf32>
    %6 = vector.broadcast %1 : vector<8x1xf32> to vector<8x256xf32>
    %7 = arith.addf %6, %5 : vector<8x256xf32>
    %c17_i32 = arith.constant 17 : i32
    %8 = tpu.dynamic_rotate %0 by %c17_i32 dim 1 : vector<8x256xf32>, i32 -> vector<8x256xf32>
    %c0_5 = arith.constant 0 : index
    %c0_6 = arith.constant 0 : index
    %c0_7 = arith.constant 0 : index
    %9 = vector.load %arg4[%c0_5, %c0_6, %c0_7] : memref<9x8x1xf32, #tpu.memory_space<vmem>>, vector<1x8x1xf32>
    %10 = vector.shape_cast %9 : vector<1x8x1xf32> to vector<8x1xf32>
    %11 = vector.broadcast %10 : vector<8x1xf32> to vector<8x256xf32>
    %12 = arith.mulf %8, %11 : vector<8x256xf32>
    %c0_8 = arith.constant 0 : index
    %c0_9 = arith.constant 0 : index
    %c0_10 = arith.constant 0 : index
    %13 = vector.load %arg6[%c0_8, %c0_9, %c0_10] : memref<9x1x256xf32, #tpu.memory_space<vmem>>, vector<1x1x256xf32>
    %14 = vector.shape_cast %13 : vector<1x1x256xf32> to vector<1x256xf32>
    %15 = vector.broadcast %14 : vector<1x256xf32> to vector<8x256xf32>
    %16 = arith.mulf %12, %15 : vector<8x256xf32>
    %17 = arith.addf %7, %16 : vector<8x256xf32>
    %c16_i32 = arith.constant 16 : i32
    %18 = tpu.dynamic_rotate %0 by %c16_i32 dim 1 : vector<8x256xf32>, i32 -> vector<8x256xf32>
    %c1 = arith.constant 1 : index
    %c0_11 = arith.constant 0 : index
    %c0_12 = arith.constant 0 : index
    %19 = vector.load %arg4[%c1, %c0_11, %c0_12] : memref<9x8x1xf32, #tpu.memory_space<vmem>>, vector<1x8x1xf32>
    %20 = vector.shape_cast %19 : vector<1x8x1xf32> to vector<8x1xf32>
    %21 = vector.broadcast %20 : vector<8x1xf32> to vector<8x256xf32>
    %22 = arith.mulf %18, %21 : vector<8x256xf32>
    %c1_13 = arith.constant 1 : index
    %c0_14 = arith.constant 0 : index
    %c0_15 = arith.constant 0 : index
    %23 = vector.load %arg6[%c1_13, %c0_14, %c0_15] : memref<9x1x256xf32, #tpu.memory_space<vmem>>, vector<1x1x256xf32>
    %24 = vector.shape_cast %23 : vector<1x1x256xf32> to vector<1x256xf32>
    %25 = vector.broadcast %24 : vector<1x256xf32> to vector<8x256xf32>
    %26 = arith.mulf %22, %25 : vector<8x256xf32>
    %27 = arith.addf %17, %26 : vector<8x256xf32>
    %c15_i32 = arith.constant 15 : i32
    %28 = tpu.dynamic_rotate %0 by %c15_i32 dim 1 : vector<8x256xf32>, i32 -> vector<8x256xf32>
    %c2 = arith.constant 2 : index
    %c0_16 = arith.constant 0 : index
    %c0_17 = arith.constant 0 : index
    %29 = vector.load %arg4[%c2, %c0_16, %c0_17] : memref<9x8x1xf32, #tpu.memory_space<vmem>>, vector<1x8x1xf32>
    %30 = vector.shape_cast %29 : vector<1x8x1xf32> to vector<8x1xf32>
    %31 = vector.broadcast %30 : vector<8x1xf32> to vector<8x256xf32>
    %32 = arith.mulf %28, %31 : vector<8x256xf32>
    %c2_18 = arith.constant 2 : index
    %c0_19 = arith.constant 0 : index
    %c0_20 = arith.constant 0 : index
    %33 = vector.load %arg6[%c2_18, %c0_19, %c0_20] : memref<9x1x256xf32, #tpu.memory_space<vmem>>, vector<1x1x256xf32>
    %34 = vector.shape_cast %33 : vector<1x1x256xf32> to vector<1x256xf32>
    %35 = vector.broadcast %34 : vector<1x256xf32> to vector<8x256xf32>
    %36 = arith.mulf %32, %35 : vector<8x256xf32>
    %37 = arith.addf %27, %36 : vector<8x256xf32>
    %c1_i32 = arith.constant 1 : i32
    %38 = tpu.dynamic_rotate %0 by %c1_i32 dim 1 : vector<8x256xf32>, i32 -> vector<8x256xf32>
    %c3 = arith.constant 3 : index
    %c0_21 = arith.constant 0 : index
    %c0_22 = arith.constant 0 : index
    %39 = vector.load %arg4[%c3, %c0_21, %c0_22] : memref<9x8x1xf32, #tpu.memory_space<vmem>>, vector<1x8x1xf32>
    %40 = vector.shape_cast %39 : vector<1x8x1xf32> to vector<8x1xf32>
    %41 = vector.broadcast %40 : vector<8x1xf32> to vector<8x256xf32>
    %42 = arith.mulf %38, %41 : vector<8x256xf32>
    %c3_23 = arith.constant 3 : index
    %c0_24 = arith.constant 0 : index
    %c0_25 = arith.constant 0 : index
    %43 = vector.load %arg6[%c3_23, %c0_24, %c0_25] : memref<9x1x256xf32, #tpu.memory_space<vmem>>, vector<1x1x256xf32>
    %44 = vector.shape_cast %43 : vector<1x1x256xf32> to vector<1x256xf32>
    %45 = vector.broadcast %44 : vector<1x256xf32> to vector<8x256xf32>
    %46 = arith.mulf %42, %45 : vector<8x256xf32>
    %47 = arith.addf %37, %46 : vector<8x256xf32>
    %c255_i32 = arith.constant 255 : i32
    %48 = tpu.dynamic_rotate %0 by %c255_i32 dim 1 : vector<8x256xf32>, i32 -> vector<8x256xf32>
    %c5 = arith.constant 5 : index
    %c0_26 = arith.constant 0 : index
    %c0_27 = arith.constant 0 : index
    %49 = vector.load %arg4[%c5, %c0_26, %c0_27] : memref<9x8x1xf32, #tpu.memory_space<vmem>>, vector<1x8x1xf32>
    %50 = vector.shape_cast %49 : vector<1x8x1xf32> to vector<8x1xf32>
    %51 = vector.broadcast %50 : vector<8x1xf32> to vector<8x256xf32>
    %52 = arith.mulf %48, %51 : vector<8x256xf32>
    %c5_28 = arith.constant 5 : index
    %c0_29 = arith.constant 0 : index
    %c0_30 = arith.constant 0 : index
    %53 = vector.load %arg6[%c5_28, %c0_29, %c0_30] : memref<9x1x256xf32, #tpu.memory_space<vmem>>, vector<1x1x256xf32>
    %54 = vector.shape_cast %53 : vector<1x1x256xf32> to vector<1x256xf32>
    %55 = vector.broadcast %54 : vector<1x256xf32> to vector<8x256xf32>
    %56 = arith.mulf %52, %55 : vector<8x256xf32>
    %57 = arith.addf %47, %56 : vector<8x256xf32>
    %c241_i32 = arith.constant 241 : i32
    %58 = tpu.dynamic_rotate %0 by %c241_i32 dim 1 : vector<8x256xf32>, i32 -> vector<8x256xf32>
    %c6 = arith.constant 6 : index
    %c0_31 = arith.constant 0 : index
    %c0_32 = arith.constant 0 : index
    %59 = vector.load %arg4[%c6, %c0_31, %c0_32] : memref<9x8x1xf32, #tpu.memory_space<vmem>>, vector<1x8x1xf32>
    %60 = vector.shape_cast %59 : vector<1x8x1xf32> to vector<8x1xf32>
    %61 = vector.broadcast %60 : vector<8x1xf32> to vector<8x256xf32>
    %62 = arith.mulf %58, %61 : vector<8x256xf32>
    %c6_33 = arith.constant 6 : index
    %c0_34 = arith.constant 0 : index
    %c0_35 = arith.constant 0 : index
    %63 = vector.load %arg6[%c6_33, %c0_34, %c0_35] : memref<9x1x256xf32, #tpu.memory_space<vmem>>, vector<1x1x256xf32>
    %64 = vector.shape_cast %63 : vector<1x1x256xf32> to vector<1x256xf32>
    %65 = vector.broadcast %64 : vector<1x256xf32> to vector<8x256xf32>
    %66 = arith.mulf %62, %65 : vector<8x256xf32>
    %67 = arith.addf %57, %66 : vector<8x256xf32>
    %c240_i32 = arith.constant 240 : i32
    %68 = tpu.dynamic_rotate %0 by %c240_i32 dim 1 : vector<8x256xf32>, i32 -> vector<8x256xf32>
    %c7 = arith.constant 7 : index
    %c0_36 = arith.constant 0 : index
    %c0_37 = arith.constant 0 : index
    %69 = vector.load %arg4[%c7, %c0_36, %c0_37] : memref<9x8x1xf32, #tpu.memory_space<vmem>>, vector<1x8x1xf32>
    %70 = vector.shape_cast %69 : vector<1x8x1xf32> to vector<8x1xf32>
    %71 = vector.broadcast %70 : vector<8x1xf32> to vector<8x256xf32>
    %72 = arith.mulf %68, %71 : vector<8x256xf32>
    %c7_38 = arith.constant 7 : index
    %c0_39 = arith.constant 0 : index
    %c0_40 = arith.constant 0 : index
    %73 = vector.load %arg6[%c7_38, %c0_39, %c0_40] : memref<9x1x256xf32, #tpu.memory_space<vmem>>, vector<1x1x256xf32>
    %74 = vector.shape_cast %73 : vector<1x1x256xf32> to vector<1x256xf32>
    %75 = vector.broadcast %74 : vector<1x256xf32> to vector<8x256xf32>
    %76 = arith.mulf %72, %75 : vector<8x256xf32>
    %77 = arith.addf %67, %76 : vector<8x256xf32>
    %c239_i32 = arith.constant 239 : i32
    %78 = tpu.dynamic_rotate %0 by %c239_i32 dim 1 : vector<8x256xf32>, i32 -> vector<8x256xf32>
    %c8 = arith.constant 8 : index
    %c0_41 = arith.constant 0 : index
    %c0_42 = arith.constant 0 : index
    %79 = vector.load %arg4[%c8, %c0_41, %c0_42] : memref<9x8x1xf32, #tpu.memory_space<vmem>>, vector<1x8x1xf32>
    %80 = vector.shape_cast %79 : vector<1x8x1xf32> to vector<8x1xf32>
    %81 = vector.broadcast %80 : vector<8x1xf32> to vector<8x256xf32>
    %82 = arith.mulf %78, %81 : vector<8x256xf32>
    %c8_43 = arith.constant 8 : index
    %c0_44 = arith.constant 0 : index
    %c0_45 = arith.constant 0 : index
    %83 = vector.load %arg6[%c8_43, %c0_44, %c0_45] : memref<9x1x256xf32, #tpu.memory_space<vmem>>, vector<1x1x256xf32>
    %84 = vector.shape_cast %83 : vector<1x1x256xf32> to vector<1x256xf32>
    %85 = vector.broadcast %84 : vector<1x256xf32> to vector<8x256xf32>
    %86 = arith.mulf %82, %85 : vector<8x256xf32>
    %87 = arith.addf %77, %86 : vector<8x256xf32>
    %88 = tpu.concatenate %87, %0 in 0 : vector<8x256xf32>, vector<8x256xf32> -> vector<16x256xf32>
    %89 = tpu.iota {dimensions = array<i32: 0>} : vector<16x1xi32>
    %c8_i32 = arith.constant 8 : i32
    %90 = vector.broadcast %c8_i32 : i32 to vector<16x1xi32>
    %91 = arith.cmpi slt, %89, %90 : vector<16x1xi32>
    %cst = arith.constant 3.000000e+00 : f32
    %92 = vector.broadcast %cst : f32 to vector<16x256xf32>
    %93 = arith.addf %88, %92 : vector<16x256xf32>
    %cst_46 = arith.constant 0.000000e+00 : f32
    %cst_47 = arith.constant 6.000000e+00 : f32
    %94 = vector.broadcast %cst_46 : f32 to vector<16x256xf32>
    %95 = arith.maximumf %94, %93 : vector<16x256xf32>
    %96 = vector.broadcast %cst_47 : f32 to vector<16x256xf32>
    %97 = arith.minimumf %96, %95 : vector<16x256xf32>
    %98 = arith.mulf %88, %97 : vector<16x256xf32>
    %cst_48 = arith.constant 0.166666672 : f32
    %99 = vector.broadcast %cst_48 : f32 to vector<16x256xf32>
    %100 = arith.mulf %98, %99 : vector<16x256xf32>
    %101 = vector.shape_cast %91 : vector<16x1xi1> to vector<16x1xi1>
    %102 = vector.broadcast %101 : vector<16x1xi1> to vector<16x256xi1>
    %103 = arith.select %102, %100, %88 : vector<16x256xi1>, vector<16x256xf32>
    %c0_49 = arith.constant 0 : index
    %c0_50 = arith.constant 0 : index
    %104 = vector.load %arg2[%c0_49, %c0_50] : memref<48x16xf32, #tpu.memory_space<vmem>>, vector<48x16xf32>
    %cst_51 = arith.constant dense<0.000000e+00> : vector<48x256xf32>
    %105 = tpu.matmul %104, %103, %cst_51 {dimension_numbers = #tpu.dot_dimension_numbers<[1], [0], [0], [1], [0, 0, 1, 1], [], []>} : vector<48x16xf32>, vector<16x256xf32>, vector<48x256xf32> -> vector<48x256xf32>
    %c0_52 = arith.constant 0 : index
    %c0_53 = arith.constant 0 : index
    %106 = vector.load %arg3[%c0_52, %c0_53] : memref<48x1xf32, #tpu.memory_space<vmem>>, vector<48x1xf32>
    %107 = vector.broadcast %106 : vector<48x1xf32> to vector<48x256xf32>
    %108 = arith.addf %105, %107 : vector<48x256xf32>
    %109 = vector.extract_strided_slice %108 {offsets = [0, 0], sizes = [16, 256], strides = [1, 1]} : vector<48x256xf32> to vector<16x256xf32>
    %110 = vector.extract_strided_slice %108 {offsets = [16, 0], sizes = [16, 256], strides = [1, 1]} : vector<48x256xf32> to vector<16x256xf32>
    %111 = arith.negf %110 : vector<16x256xf32>
    %112 = math.exp %111 : vector<16x256xf32>
    %cst_54 = arith.constant 1.000000e+00 : f32
    %113 = vector.broadcast %cst_54 : f32 to vector<16x256xf32>
    %114 = arith.addf %113, %112 : vector<16x256xf32>
    %115 = arith.divf %113, %114 : vector<16x256xf32>
    %116 = vector.extract_strided_slice %108 {offsets = [32, 0], sizes = [16, 256], strides = [1, 1]} : vector<48x256xf32> to vector<16x256xf32>
    %117 = arith.mulf %109, %115 : vector<16x256xf32>
    %118 = arith.addf %117, %116 : vector<16x256xf32>
    %cst_55 = arith.constant 3.000000e+00 : f32
    %119 = vector.broadcast %cst_55 : f32 to vector<16x256xf32>
    %120 = arith.addf %118, %119 : vector<16x256xf32>
    %cst_56 = arith.constant 0.000000e+00 : f32
    %cst_57 = arith.constant 6.000000e+00 : f32
    %121 = vector.broadcast %cst_56 : f32 to vector<16x256xf32>
    %122 = arith.maximumf %121, %120 : vector<16x256xf32>
    %123 = vector.broadcast %cst_57 : f32 to vector<16x256xf32>
    %124 = arith.minimumf %123, %122 : vector<16x256xf32>
    %125 = arith.mulf %118, %124 : vector<16x256xf32>
    %cst_58 = arith.constant 0.166666672 : f32
    %126 = vector.broadcast %cst_58 : f32 to vector<16x256xf32>
    %127 = arith.mulf %125, %126 : vector<16x256xf32>
    %c0_59 = arith.constant 0 : index
    %c0_60 = arith.constant 0 : index
    %128 = vector.load %arg7[%c0_59, %c0_60] : memref<16x256xf32, #tpu.memory_space<vmem>>, vector<16x256xf32>
    tpu.vector_store %arg7[%c0_59, %c0_60], %127 {strides = array<i32>} : memref<16x256xf32, #tpu.memory_space<vmem>>, vector<16x256xf32>,
    return
  }
  func.func @transform_0(%arg0: i32) -> (i32, i32) {
    %c0_i32 = arith.constant 0 : i32
    %c0_i32_0 = arith.constant 0 : i32
    return %arg0, %c0_i32 : i32, i32
  }
  func.func @transform_1(%arg0: i32) -> (i32, i32) {
    %c0_i32 = arith.constant 0 : i32
    %c0_i32_0 = arith.constant 0 : i32
    %c0_i32_1 = arith.constant 0 : i32
    return %c0_i32, %c0_i32_0 : i32, i32
  }
  func.func @transform_2(%arg0: i32) -> (i32, i32) {
    %c0_i32 = arith.constant 0 : i32
    %c0_i32_0 = arith.constant 0 : i32
    %c0_i32_1 = arith.constant 0 : i32
    return %c0_i32, %c0_i32_0 : i32, i32
  }
  func.func @transform_3(%arg0: i32) -> (i32, i32, i32) {
    %c0_i32 = arith.constant 0 : i32
    %c0_i32_0 = arith.constant 0 : i32
    %c0_i32_1 = arith.constant 0 : i32
    %c0_i32_2 = arith.constant 0 : i32
    return %c0_i32, %c0_i32_0, %c0_i32_1 : i32, i32, i32
  }
  func.func @transform_4(%arg0: i32) -> (i32, i32) {
    %c0_i32 = arith.constant 0 : i32
    %c0_i32_0 = arith.constant 0 : i32
    %c0_i32_1 = arith.constant 0 : i32
    return %c0_i32, %c0_i32_0 : i32, i32
  }
  func.func @transform_5(%arg0: i32) -> (i32, i32, i32) {
    %c0_i32 = arith.constant 0 : i32
    %c0_i32_0 = arith.constant 0 : i32
    %c0_i32_1 = arith.constant 0 : i32
    %c0_i32_2 = arith.constant 0 : i32
    return %c0_i32, %c0_i32_0, %c0_i32_1 : i32, i32, i32
  }
  func.func @transform_6(%arg0: i32) -> (i32, i32) {
    %c0_i32 = arith.constant 0 : i32
    %c0_i32_0 = arith.constant 0 : i32
    return %arg0, %c0_i32 : i32, i32
  }
}

</mosaic_0001>

<llo_original>
// kernel: tpu_custom_call.1
$region0: #{tpu_custom_call.1}
  #allocation0 [shape = 'u32[]', space=smem, size = 0x4, offset = 0x4, fixed_abs, tag = 'smem constant byte address 0x4 - core index']
  #allocation1 [shape = 'u32[144,128]{1,0:T(1,128)}', space=vmem, size = 0x12000, scoped, tag = 'internal scratch']
  %s0 = inlined_call_operand.vmem [shape: f32[8,256], index: 0, kind: input, shape index: {}]
  %s1 = inlined_call_operand.vmem [shape: f32[48,16], index: 1, kind: input, shape index: {}]
  %s2 = inlined_call_operand.vmem [shape: f32[48,1], index: 2, kind: input, shape index: {}]
  %s3 = inlined_call_operand.vmem [shape: f32[9,8,1], index: 3, kind: input, shape index: {}]
  %s4 = inlined_call_operand.vmem [shape: f32[8,1], index: 4, kind: input, shape index: {}]
  %s5 = inlined_call_operand.vmem [shape: f32[9,1,256], index: 5, kind: input, shape index: {}]
  %s6 = inlined_call_operand.hbm [shape: f32[16,256], index: 6, kind: output, shape index: {}]
  %s7 = sld [smem:[#allocation0]]
  $region34: #{tpu_custom_call.1} parent=0
    _
  %s9 = ssub.s32 1, %s7
  %s10 = scalar_select 0, %s9, %s7
  $region1: #{tpu_custom_call.1} parent=0
    #allocation2 [shape = 'u8[16384]{0}', space=vmem, size = 0x4000, scoped, tag = 'output window, operand 0, single buffered']
    #allocation3 [shape = 's32[1]{0}', space=sflag, size = 0x4, scoped, tag = 'scoped memory for tpu_custom_call.1']
    %11 = vsyncpa [#allocation3], 0
    // Predicated region
    $region2: #{tpu_custom_call.1} parent=1 // pred_check
      _
    $region3: #{tpu_custom_call.1} parent=1 // pred_check_branch
      %13 = sbr.rel (0) target = $region5
    $region4: #{tpu_custom_call.1} parent=1 // pred_region
      _
    $region5: #{tpu_custom_call.1} parent=1 // pred_fallthru
      _
    // Predicated region
    $region6: #{tpu_custom_call.1} parent=1 // pred_check
      _
    $region7: #{tpu_custom_call.1} parent=1 // pred_check_branch
      %15 = sbr.rel (0) target = $region9
    $region8: #{tpu_custom_call.1} parent=1 // pred_region
      _
    $region9: #{tpu_custom_call.1} parent=1 // pred_fallthru
      _
    // Predicated region
    $region10: #{tpu_custom_call.1} parent=1 // pred_check
      _
    $region11: #{tpu_custom_call.1} parent=1 // pred_check_branch
      %17 = sbr.rel (0) target = $region13
    $region12: #{tpu_custom_call.1} parent=1 // pred_region
      _
    $region13: #{tpu_custom_call.1} parent=1 // pred_fallthru
      _
    // Predicated region
    $region14: #{tpu_custom_call.1} parent=1 // pred_check
      _
    $region15: #{tpu_custom_call.1} parent=1 // pred_check_branch
      %19 = sbr.rel (0) target = $region17
    $region16: #{tpu_custom_call.1} parent=1 // pred_region
      _
    $region17: #{tpu_custom_call.1} parent=1 // pred_fallthru
      _
    // Predicated region
    $region18: #{tpu_custom_call.1} parent=1 // pred_check
      _
    $region19: #{tpu_custom_call.1} parent=1 // pred_check_branch
      %21 = sbr.rel (0) target = $region21
    $region20: #{tpu_custom_call.1} parent=1 // pred_region
      _
    $region21: #{tpu_custom_call.1} parent=1 // pred_fallthru
      _
    // Predicated region
    $region22: #{tpu_custom_call.1} parent=1 // pred_check
      _
    $region23: #{tpu_custom_call.1} parent=1 // pred_check_branch
      %23 = sbr.rel (0) target = $region25
    $region24: #{tpu_custom_call.1} parent=1 // pred_region
      _
    $region25: #{tpu_custom_call.1} parent=1 // pred_fallthru
      _
    %v24 = vld [vmem:[%s0] sm:$0xff]
    %v25 = vld [vmem:[%s0 + $0x8] sm:$0xff]
    %v26 = vld [vmem:[%s4] sm:$0xff]
    %s27 = scalar_lea.vmem %s3, 32
    %v28 = vld [vmem:[%s27] sm:$0xff]
    %30 = vset.pattern.permute.xlu0 0
    %31 = vperm.xlu0 %30, %v28
    %v32 = vpop.permute.xlu0 %31
    %v34 = vmul.f32 %v24, %v32
    %v35 = vmul.f32 %v25, %v32
    %37 = vset.pattern.permute.xlu0 0
    %38 = vperm.xlu0 %37, %v26
    %v39 = vpop.permute.xlu0 %38
    %v41 = vadd.f32 %v39, %v34
    %v42 = vadd.f32 %v39, %v35
    %43 = vrot.lane.b32.xlu0 %v24, 17
    %v44 = vpop.permute.xlu0 %43
    %45 = vrot.lane.b32.xlu0 %v25, 17
    %v46 = vpop.permute.xlu0 %45
    %v47 = vlaneseq
    %v48 = vand.u32 %v47, 127
    %vm49 = vcmp.lt.s32.totalorder %v48, 17
    %v50 = vsel %vm49, %v44, %v46
    %v51 = vsel %vm49, %v46, %v44
    %v52 = vld [vmem:[%s3] sm:$0xff]
    %54 = vset.pattern.permute.xlu0 0
    %55 = vperm.xlu0 %54, %v52
    %v56 = vpop.permute.xlu0 %55
    %v58 = vmul.f32 %v51, %v56
    %v59 = vmul.f32 %v50, %v56
    %v60 = vld [vmem:[%s5] sm:$0x3]
    %v62 = vlaneseq
    %v63 = vshrl.u32 %v62, 7
    %v64 = vsub.s32 0, %v63
    %v65 = vrot.slane %v60, %v64
    %v66 = vlaneseq
    %v67 = vshrl.u32 %v66, 7
    %v68 = vsub.s32 1, %v67
    %v69 = vrot.slane %v60, %v68
    %v72 = vmul.f32 %v58, %v65
    %v73 = vmul.f32 %v59, %v69
    %v74 = vadd.f32 %v41, %v72
    %v75 = vadd.f32 %v42, %v73
    %76 = vrot.lane.b32.xlu0 %v24, 16
    %v77 = vpop.permute.xlu0 %76
    %78 = vrot.lane.b32.xlu0 %v25, 16
    %v79 = vpop.permute.xlu0 %78
    %vm80 = vcmp.lt.s32.totalorder %v48, 16
    %v81 = vsel %vm80, %v77, %v79
    %v82 = vsel %vm80, %v79, %v77
    %s83 = scalar_lea.vmem %s3, 8
    %v84 = vld [vmem:[%s83] sm:$0xff]
    %86 = vset.pattern.permute.xlu0 0
    %87 = vperm.xlu0 %86, %v84
    %v88 = vpop.permute.xlu0 %87
    %v90 = vmul.f32 %v82, %v88
    %v91 = vmul.f32 %v81, %v88
    %s92 = scalar_lea.vmem %s5, 2
    %v93 = vld [vmem:[%s92] sm:$0x3]
    %v95 = vlaneseq
    %v96 = vshrl.u32 %v95, 7
    %v97 = vsub.s32 0, %v96
    %v98 = vrot.slane %v93, %v97
    %v99 = vlaneseq
    %v100 = vshrl.u32 %v99, 7
    %v101 = vsub.s32 1, %v100
    %v102 = vrot.slane %v93, %v101
    %v105 = vmul.f32 %v90, %v98
    %v106 = vmul.f32 %v91, %v102
    %v107 = vadd.f32 %v74, %v105
    %v108 = vadd.f32 %v75, %v106
    %109 = vrot.lane.b32.xlu0 %v24, 15
    %v110 = vpop.permute.xlu0 %109
    %111 = vrot.lane.b32.xlu0 %v25, 15
    %v112 = vpop.permute.xlu0 %111
    %vm113 = vcmp.lt.s32.totalorder %v48, 15
    %v114 = vsel %vm113, %v110, %v112
    %v115 = vsel %vm113, %v112, %v110
    %s116 = scalar_lea.vmem %s3, 16
    %v117 = vld [vmem:[%s116] sm:$0xff]
    %119 = vset.pattern.permute.xlu0 0
    %120 = vperm.xlu0 %119, %v117
    %v121 = vpop.permute.xlu0 %120
    %v123 = vmul.f32 %v115, %v121
    %v124 = vmul.f32 %v114, %v121
    %s125 = scalar_lea.vmem %s5, 4
    %v126 = vld [vmem:[%s125] sm:$0x3]
    %v128 = vlaneseq
    %v129 = vshrl.u32 %v128, 7
    %v130 = vsub.s32 0, %v129
    %v131 = vrot.slane %v126, %v130
    %v132 = vlaneseq
    %v133 = vshrl.u32 %v132, 7
    %v134 = vsub.s32 1, %v133
    %v135 = vrot.slane %v126, %v134
    %v138 = vmul.f32 %v123, %v131
    %v139 = vmul.f32 %v124, %v135
    %v140 = vadd.f32 %v107, %v138
    %v141 = vadd.f32 %v108, %v139
    %142 = vrot.lane.b32.xlu0 %v24, 1
    %v143 = vpop.permute.xlu0 %142
    %144 = vrot.lane.b32.xlu0 %v25, 1
    %v145 = vpop.permute.xlu0 %144
    %vm146 = vcmp.lt.s32.totalorder %v48, 1
    %v147 = vsel %vm146, %v143, %v145
    %v148 = vsel %vm146, %v145, %v143
    %s149 = scalar_lea.vmem %s3, 24
    %v150 = vld [vmem:[%s149] sm:$0xff]
    %152 = vset.pattern.permute.xlu0 0
    %153 = vperm.xlu0 %152, %v150
    %v154 = vpop.permute.xlu0 %153
    %v156 = vmul.f32 %v148, %v154
    %v157 = vmul.f32 %v147, %v154
    %s158 = scalar_lea.vmem %s5, 6
    %v159 = vld [vmem:[%s158] sm:$0x3]
    %v161 = vlaneseq
    %v162 = vshrl.u32 %v161, 7
    %v163 = vsub.s32 0, %v162
    %v164 = vrot.slane %v159, %v163
    %v165 = vlaneseq
    %v166 = vshrl.u32 %v165, 7
    %v167 = vsub.s32 1, %v166
    %v168 = vrot.slane %v159, %v167
    %v171 = vmul.f32 %v156, %v164
    %v172 = vmul.f32 %v157, %v168
    %v173 = vadd.f32 %v140, %v171
    %v174 = vadd.f32 %v141, %v172
    %175 = vrot.lane.b32.xlu0 %v24, 127
    %v176 = vpop.permute.xlu0 %175
    %177 = vrot.lane.b32.xlu0 %v25, 127
    %v178 = vpop.permute.xlu0 %177
    %vm179 = vcmp.lt.s32.totalorder %v48, 127
    %v180 = vsel %vm179, %v176, %v178
    %v181 = vsel %vm179, %v178, %v176
    %s182 = scalar_lea.vmem %s3, 40
    %v183 = vld [vmem:[%s182] sm:$0xff]
    %185 = vset.pattern.permute.xlu0 0
    %186 = vperm.xlu0 %185, %v183
    %v187 = vpop.permute.xlu0 %186
    %v189 = vmul.f32 %v180, %v187
    %v190 = vmul.f32 %v181, %v187
    %s191 = scalar_lea.vmem %s5, 10
    %v192 = vld [vmem:[%s191] sm:$0x3]
    %v194 = vlaneseq
    %v195 = vshrl.u32 %v194, 7
    %v196 = vsub.s32 0, %v195
    %v197 = vrot.slane %v192, %v196
    %v198 = vlaneseq
    %v199 = vshrl.u32 %v198, 7
    %v200 = vsub.s32 1, %v199
    %v201 = vrot.slane %v192, %v200
    %v204 = vmul.f32 %v189, %v197
    %v205 = vmul.f32 %v190, %v201
    %v206 = vadd.f32 %v173, %v204
    %v207 = vadd.f32 %v174, %v205
    %208 = vrot.lane.b32.xlu0 %v24, 113
    %v209 = vpop.permute.xlu0 %208
    %210 = vrot.lane.b32.xlu0 %v25, 113
    %v211 = vpop.permute.xlu0 %210
    %vm212 = vcmp.lt.s32.totalorder %v48, 113
    %v213 = vsel %vm212, %v209, %v211
    %v214 = vsel %vm212, %v211, %v209
    %s215 = scalar_lea.vmem %s3, 48
    %v216 = vld [vmem:[%s215] sm:$0xff]
    %218 = vset.pattern.permute.xlu0 0
    %219 = vperm.xlu0 %218, %v216
    %v220 = vpop.permute.xlu0 %219
    %v222 = vmul.f32 %v213, %v220
    %v223 = vmul.f32 %v214, %v220
    %s224 = scalar_lea.vmem %s5, 12
    %v225 = vld [vmem:[%s224] sm:$0x3]
    %v227 = vlaneseq
    %v228 = vshrl.u32 %v227, 7
    %v229 = vsub.s32 0, %v228
    %v230 = vrot.slane %v225, %v229
    %v231 = vlaneseq
    %v232 = vshrl.u32 %v231, 7
    %v233 = vsub.s32 1, %v232
    %v234 = vrot.slane %v225, %v233
    %v237 = vmul.f32 %v222, %v230
    %v238 = vmul.f32 %v223, %v234
    %v239 = vadd.f32 %v206, %v237
    %v240 = vadd.f32 %v207, %v238
    %241 = vrot.lane.b32.xlu0 %v24, 112
    %v242 = vpop.permute.xlu0 %241
    %243 = vrot.lane.b32.xlu0 %v25, 112
    %v244 = vpop.permute.xlu0 %243
    %vm245 = vcmp.lt.s32.totalorder %v48, 112
    %v246 = vsel %vm245, %v242, %v244
    %v247 = vsel %vm245, %v244, %v242
    %s248 = scalar_lea.vmem %s3, 56
    %v249 = vld [vmem:[%s248] sm:$0xff]
    %251 = vset.pattern.permute.xlu0 0
    %252 = vperm.xlu0 %251, %v249
    %v253 = vpop.permute.xlu0 %252
    %v255 = vmul.f32 %v246, %v253
    %v256 = vmul.f32 %v247, %v253
    %s257 = scalar_lea.vmem %s5, 14
    %v258 = vld [vmem:[%s257] sm:$0x3]
    %v260 = vlaneseq
    %v261 = vshrl.u32 %v260, 7
    %v262 = vsub.s32 0, %v261
    %v263 = vrot.slane %v258, %v262
    %v264 = vlaneseq
    %v265 = vshrl.u32 %v264, 7
    %v266 = vsub.s32 1, %v265
    %v267 = vrot.slane %v258, %v266
    %v270 = vmul.f32 %v255, %v263
    %v271 = vmul.f32 %v256, %v267
    %v272 = vadd.f32 %v239, %v270
    %v273 = vadd.f32 %v240, %v271
    %274 = vrot.lane.b32.xlu0 %v24, 111
    %v275 = vpop.permute.xlu0 %274
    %276 = vrot.lane.b32.xlu0 %v25, 111
    %v277 = vpop.permute.xlu0 %276
    %vm278 = vcmp.lt.s32.totalorder %v48, 111
    %v279 = vsel %vm278, %v275, %v277
    %v280 = vsel %vm278, %v277, %v275
    %s281 = scalar_lea.vmem %s3, 64
    %v282 = vld [vmem:[%s281] sm:$0xff]
    %284 = vset.pattern.permute.xlu0 0
    %285 = vperm.xlu0 %284, %v282
    %v286 = vpop.permute.xlu0 %285
    %v288 = vmul.f32 %v279, %v286
    %v289 = vmul.f32 %v280, %v286
    %s290 = scalar_lea.vmem %s5, 16
    %v291 = vld [vmem:[%s290] sm:$0x3]
    %v293 = vlaneseq
    %v294 = vshrl.u32 %v293, 7
    %v295 = vsub.s32 0, %v294
    %v296 = vrot.slane %v291, %v295
    %v297 = vlaneseq
    %v298 = vshrl.u32 %v297, 7
    %v299 = vsub.s32 1, %v298
    %v300 = vrot.slane %v291, %v299
    %v303 = vmul.f32 %v288, %v296
    %v304 = vmul.f32 %v289, %v300
    %v305 = vadd.f32 %v272, %v303
    %v306 = vadd.f32 %v273, %v304
    %v307 = vlaneseq
    %v308 = vshrl.u32 %v307, 7
    %v309 = vadd.s32 %v308, 8
    %vm310 = vcmp.lt.s32.totalorder %v308, 8
    %vm311 = vcmp.lt.s32.totalorder %v309, 8
    %v312 = vadd.f32 %v305, 3.0
    %v313 = vadd.f32 %v306, 3.0
    %v314 = vadd.f32 %v24, 3.0
    %v315 = vadd.f32 %v25, 3.0
    %v316 = vmax.f32 %v312, 0.0
    %v317 = vmax.f32 %v313, 0.0
    %v318 = vmax.f32 %v314, 0.0
    %v319 = vmax.f32 %v315, 0.0
    %v320 = vmin.f32 %v316, 6.0
    %v321 = vmin.f32 %v317, 6.0
    %v322 = vmin.f32 %v318, 6.0
    %v323 = vmin.f32 %v319, 6.0
    %v324 = vmul.f32 %v305, %v320
    %v325 = vmul.f32 %v306, %v321
    %v326 = vmul.f32 %v24, %v322
    %v327 = vmul.f32 %v25, %v323
    %v328 = vmul.f32 %v324, 0.16666667
    %v329 = vmul.f32 %v325, 0.16666667
    %v330 = vmul.f32 %v326, 0.16666667
    %v331 = vmul.f32 %v327, 0.16666667
    %v332 = vsel %vm310, 1, 0
    %v333 = vsel %vm311, 1, 0
    %vm334 = vcmp.eq.s32.totalorder %v332, 1
    %vm335 = vcmp.eq.s32.totalorder %v333, 1
    %v336 = vsel %vm334, %v328, %v305
    %v337 = vsel %vm334, %v329, %v306
    %v338 = vsel %vm335, %v330, %v24
    %v339 = vsel %vm335, %v331, %v25
    %v340 = vld [vmem:[%s1] sm:$0xff]
    %v341 = vld [vmem:[%s1 + $0x8] sm:$0xff]
    %v342 = vld [vmem:[%s1 + $0x10] sm:$0xff]
    %v343 = vld [vmem:[%s1 + $0x18] sm:$0xff]
    %v344 = vld [vmem:[%s1 + $0x20] sm:$0xff]
    %v345 = vld [vmem:[%s1 + $0x28] sm:$0xff]
    %v346 = vld [vmem:[%s2] sm:$0xff]
    %v347 = vld [vmem:[%s2 + $0x8] sm:$0xff]
    %v348 = vld [vmem:[%s2 + $0x10] sm:$0xff]
    %v349 = vld [vmem:[%s2 + $0x18] sm:$0xff]
    %v350 = vld [vmem:[%s2 + $0x20] sm:$0xff]
    %v351 = vld [vmem:[%s2 + $0x28] sm:$0xff]
    %353 = vset.pattern.permute.xlu0 0
    %354 = vperm.xlu0 %353, %v346
    %v355 = vpop.permute.xlu0 %354
    %358 = vset.pattern.permute.xlu0 0
    %359 = vperm.xlu0 %358, %v347
    %v360 = vpop.permute.xlu0 %359
    %363 = vset.pattern.permute.xlu0 0
    %364 = vperm.xlu0 %363, %v348
    %v365 = vpop.permute.xlu0 %364
    %368 = vset.pattern.permute.xlu0 0
    %369 = vperm.xlu0 %368, %v349
    %v370 = vpop.permute.xlu0 %369
    %373 = vset.pattern.permute.xlu0 0
    %374 = vperm.xlu0 %373, %v350
    %v375 = vpop.permute.xlu0 %374
    %378 = vset.pattern.permute.xlu0 0
    %379 = vperm.xlu0 %378, %v351
    %v380 = vpop.permute.xlu0 %379
    %vm382 = vcmask 130048
    %v384 = vsel %vm382, %v340, 0
    %v387 = vsel %vm382, %v341, 0
    %v390 = vsel %vm382, %v342, 0
    %v393 = vsel %vm382, %v343, 0
    %v396 = vsel %vm382, %v344, 0
    %v399 = vsel %vm382, %v345, 0
    %401 = vmatprep.subr.mxu0 %v337
    %402 = vmatpush1.msra.mxu0 %v336
    %403 = vmatprep.subr.mxu0 %v339
    %404 = vmatpush1.msra.mxu0 %v338
    %405 = vmatprep.subr.mxu0 0.0
    %406 = vmatpush1.msra.mxu0 0.0
    %407 = vmatprep.subr.mxu0 0.0
    %408 = vmatpush1.msra.mxu0 0.0
    %409 = vmatprep.subr.mxu0 0.0
    %410 = vmatpush1.msra.mxu0 0.0
    %411 = vmatprep.subr.mxu0 0.0
    %412 = vmatpush1.msra.mxu0 0.0
    %413 = vmatprep.subr.mxu0 0.0
    %414 = vmatpush1.msra.mxu0 0.0
    %415 = vmatprep.subr.mxu0 0.0
    %416 = vmatpush1.msra.mxu0 0.0
    %417 = vmatprep.subr.mxu0 0.0
    %418 = vmatpush1.msra.mxu0 0.0
    %419 = vmatprep.subr.mxu0 0.0
    %420 = vmatpush1.msra.mxu0 0.0
    %421 = vmatprep.subr.mxu0 0.0
    %422 = vmatpush1.msra.mxu0 0.0
    %423 = vmatprep.subr.mxu0 0.0
    %424 = vmatpush1.msra.mxu0 0.0
    %425 = vmatprep.subr.mxu0 0.0
    %426 = vmatpush1.msra.mxu0 0.0
    %427 = vmatprep.subr.mxu0 0.0
    %428 = vmatpush1.msra.mxu0 0.0
    %429 = vmatprep.subr.mxu0 0.0
    %430 = vmatpush1.msra.mxu0 0.0
    %431 = vmatprep.subr.mxu0 0.0
    %432 = vmatpush1.msra.mxu0 0.0
    %433 = vmatprep.subr.mxu0 0.0
    %434 = vmatpush1.msra.mxu0 0.0
    %435 = vmatprep.subr.mxu0 0.0
    %436 = vmatpush1.msra.mxu0 0.0
    %437 = vmatprep.subr.mxu0 0.0
    %438 = vmatpush1.msra.mxu0 0.0
    %439 = vmatprep.subr.mxu0 0.0
    %440 = vmatpush1.msra.mxu0 0.0
    %441 = vmatprep.subr.mxu0 0.0
    %442 = vmatpush1.msra.mxu0 0.0
    %443 = vmatprep.subr.mxu0 0.0
    %444 = vmatpush1.msra.mxu0 0.0
    %445 = vmatprep.subr.mxu0 0.0
    %446 = vmatpush1.msra.mxu0 0.0
    %447 = vmatprep.subr.mxu0 0.0
    %448 = vmatpush1.msra.mxu0 0.0
    %449 = vmatprep.subr.mxu0 0.0
    %450 = vmatpush1.msra.mxu0 0.0
    %451 = vmatprep.subr.mxu0 0.0
    %452 = vmatpush1.msra.mxu0 0.0
    %453 = vmatprep.subr.mxu0 0.0
    %454 = vmatpush1.msra.mxu0 0.0
    %455 = vmatprep.subr.mxu0 0.0
    %456 = vmatpush1.msra.mxu0 0.0
    %457 = vmatprep.subr.mxu0 0.0
    %458 = vmatpush1.msra.mxu0 0.0
    %459 = vmatprep.subr.mxu0 0.0
    %460 = vmatpush1.msra.mxu0 0.0
    %461 = vmatprep.subr.mxu0 0.0
    %462 = vmatpush1.msra.mxu0 0.0
    %463 = vmatprep.subr.mxu0 0.0
    %464 = vmatpush1.msra.mxu0 0.0
    %465 = vmatprep.mubr.f32.mxu0 0.0
    %466 = vmatmul.mubr.f32.gmra.mrb[0].mxu0 %v384
    %v467 = vpop.f32.mrb[0].mxu0
    %v468 = vadd.f32 %v355, %v467
    %v469 = vpop.f32.mrb[0].mxu0
    %v470 = vadd.f32 %v355, %v469
    %471 = vmatprep.mubr.f32.mxu0 0.0
    %472 = vmatmul.mubr.f32.gmra.mrb[0].mxu0 %v387
    %v473 = vpop.f32.mrb[0].mxu0
    %v474 = vadd.f32 %v360, %v473
    %v475 = vpop.f32.mrb[0].mxu0
    %v476 = vadd.f32 %v360, %v475
    %477 = vmatprep.mubr.f32.mxu0 0.0
    %478 = vmatmul.mubr.f32.gmra.mrb[0].mxu0 %v390
    %v479 = vpop.f32.mrb[0].mxu0
    %v480 = vadd.f32 %v365, %v479
    %v481 = vpop.f32.mrb[0].mxu0
    %v482 = vadd.f32 %v365, %v481
    %483 = vmatprep.mubr.f32.mxu0 0.0
    %484 = vmatmul.mubr.f32.gmra.mrb[0].mxu0 %v393
    %v485 = vpop.f32.mrb[0].mxu0
    %v486 = vadd.f32 %v370, %v485
    %v487 = vpop.f32.mrb[0].mxu0
    %v488 = vadd.f32 %v370, %v487
    %489 = vmatprep.mubr.f32.mxu0 0.0
    %490 = vmatmul.mubr.f32.gmra.mrb[0].mxu0 %v396
    %v491 = vpop.f32.mrb[0].mxu0
    %v492 = vadd.f32 %v375, %v491
    %v493 = vpop.f32.mrb[0].mxu0
    %v494 = vadd.f32 %v375, %v493
    %495 = vmatprep.mubr.f32.mxu0 0.0
    %496 = vmatmul.mubr.f32.gmra.mrb[0].mxu0 %v399
    %v497 = vpop.f32.mrb[0].mxu0
    %v498 = vadd.f32 %v380, %v497
    %v499 = vpop.f32.mrb[0].mxu0
    %v500 = vadd.f32 %v380, %v499
    %501 = vdwg.mxu0
    %v502 = vxor.u32 %v480, 2147483648
    %v503 = vxor.u32 %v482, 2147483648
    %v504 = vxor.u32 %v486, 2147483648
    %v505 = vxor.u32 %v488, 2147483648
    %v506 = vmul.f32 %v502, 1.442695
    %v507 = vpow.pop %v506
    %v508 = vmul.f32 %v503, 1.442695
    %v509 = vpow.pop %v508
    %v510 = vmul.f32 %v504, 1.442695
    %v511 = vpow.pop %v510
    %v512 = vmul.f32 %v505, 1.442695
    %v513 = vpow.pop %v512
    %v514 = vadd.f32 %v507, 1.0
    %v515 = vadd.f32 %v509, 1.0
    %v516 = vadd.f32 %v511, 1.0
    %v517 = vadd.f32 %v513, 1.0
    %v518 = vrcp.pop %v514
    %v519 = vmul.f32 1.0, %v518
    %v520 = vrcp.pop %v515
    %v521 = vmul.f32 1.0, %v520
    %v522 = vrcp.pop %v516
    %v523 = vmul.f32 1.0, %v522
    %v524 = vrcp.pop %v517
    %v525 = vmul.f32 1.0, %v524
    %v526 = vmul.f32 %v468, %v519
    %v527 = vmul.f32 %v470, %v521
    %v528 = vmul.f32 %v474, %v523
    %v529 = vmul.f32 %v476, %v525
    %v530 = vadd.f32 %v526, %v492
    %v531 = vadd.f32 %v527, %v494
    %v532 = vadd.f32 %v528, %v498
    %v533 = vadd.f32 %v529, %v500
    %v534 = vadd.f32 %v530, 3.0
    %v535 = vadd.f32 %v531, 3.0
    %v536 = vadd.f32 %v532, 3.0
    %v537 = vadd.f32 %v533, 3.0
    %v538 = vmax.f32 %v534, 0.0
    %v539 = vmax.f32 %v535, 0.0
    %v540 = vmax.f32 %v536, 0.0
    %v541 = vmax.f32 %v537, 0.0
    %v542 = vmin.f32 %v538, 6.0
    %v543 = vmin.f32 %v539, 6.0
    %v544 = vmin.f32 %v540, 6.0
    %v545 = vmin.f32 %v541, 6.0
    %v546 = vmul.f32 %v530, %v542
    %v547 = vmul.f32 %v531, %v543
    %v548 = vmul.f32 %v532, %v544
    %v549 = vmul.f32 %v533, %v545
    %v550 = vmul.f32 %v546, 0.16666667
    %v551 = vmul.f32 %v547, 0.16666667
    %v552 = vmul.f32 %v548, 0.16666667
    %v553 = vmul.f32 %v549, 0.16666667
    %554 = vst [vmem:[#allocation2] sm:$0xff] %v550
    %555 = vst [vmem:[#allocation2 + $0x8] sm:$0xff] %v551
    %556 = vst [vmem:[#allocation2 + $0x10] sm:$0xff] %v552
    %557 = vst [vmem:[#allocation2 + $0x18] sm:$0xff] %v553
    // Predicated region
    $region26: #{tpu_custom_call.1} parent=1 // pred_check
      _
    $region27: #{tpu_custom_call.1} parent=1 // pred_check_branch
      %559 = sbr.rel (0) target = $region29
    $region28: #{tpu_custom_call.1} parent=1 // pred_region
      %s561 = ssub.s32 512, 512
      %562 = vsyncadd [#allocation3], %s561
      %s563 = sshll.u32 [#allocation2], 4
      %s564 = int_to_ptr.vmem [resolvable:$true] %s563
      %569 = dma.vmem_to_hbm [thread:$0]  %s564, 512, %s6, [#allocation3], 256, 256, 16
    $region29: #{tpu_custom_call.1} parent=1 // pred_fallthru
      _
    // Predicated region
    $region30: #{tpu_custom_call.1} parent=1 // pred_check
      _
    $region31: #{tpu_custom_call.1} parent=1 // pred_check_branch
      %571 = sbr.rel (0) target = $region33
    $region32: #{tpu_custom_call.1} parent=1 // pred_region
      %572 = dma.done [#allocation3], 512
    $region33: #{tpu_custom_call.1} parent=1 // pred_fallthru
      _
    %573 = vsyncpa [#allocation3], 1

</llo_original>
